<compile_context>
chip_gen: v7x
topology: tpu7x:2x2x1
jax: 0.10.0
libtpu: 0.0.40
codegen_flags: <defaults>
</compile_context>

<pallas_src>
import jax
import jax.numpy as jnp
from jax.experimental import pallas as pl
from jax.experimental.pallas import tpu as pltpu

BN_EPS = 1e-5


def cvnp_kernel(xT_ref, w1t_ref, pp_ref, b2_ref, o_ref):
    # xT_ref : (D, N)  input, batch on the lane axis
    # w1t_ref: (H, D)  Linear-1 weight (transposed)
    # pp_ref : (H, 3)  packed per-feature params, columns = [gamma, beta, w2]
    # b2_ref : (1, 1)  Linear-2 bias (SMEM scalar)
    # o_ref  : (1, N)  lane-dense output
    xT = xT_ref[...]

    # Linear 1 on the MXU.  b1 is omitted: it cancels under train-mode BatchNorm.
    h = jnp.dot(w1t_ref[...], xT, preferred_element_type=jnp.float32)   # (H, N)

    # BatchNorm1d (training mode): biased batch statistics over the lane (batch)
    # axis, two independent reductions, fused into one scale/shift.
    mean = jnp.mean(h, axis=1, keepdims=True)                           # (H, 1)
    mean_sq = jnp.mean(h * h, axis=1, keepdims=True)                    # (H, 1)
    var = mean_sq - mean * mean

    pp = pp_ref[...]                                                    # (H, 3)
    gamma = pp[:, 0:1]
    beta = pp[:, 1:2]
    w2 = pp[:, 2:3]

    scale = gamma * jax.lax.rsqrt(var + BN_EPS)                         # (H, 1)
    shift = beta - mean * scale                                         # (H, 1)

    h_act = jnp.maximum(h * scale + shift, 0.0)                         # (H, N)

    # Linear 2: contract the feature (sublane) axis -> lane-dense (1, N).
    o_ref[...] = jnp.sum(h_act * w2, axis=0, keepdims=True) + b2_ref[0, 0]


def cvnp_forward(X_train, y_train, y_target, params):
    w1, b1, gamma, beta, w2, b2 = params   # b1 intentionally unused (cancels in BN)
    N = X_train.shape[0]
    L = y_train.shape[1]
    D = 1 + 2 * L
    H = w1.shape[1]

    # Glue (as in the PyTorch forward), but assembled directly in the transposed
    # (D, N) layout so the kernel's VMEM tiles are lane-dense in the batch dim.
    xT = jnp.concatenate(
        (X_train.reshape(1, N), y_train.T, y_target.T), axis=0
    ).astype(jnp.float32)                                               # (D, N)
    w1t = jnp.transpose(w1).astype(jnp.float32)                         # (H, D)

    # One packed slab for all tiny per-feature params -> a single VMEM DMA.
    pp = jnp.stack(
        (gamma.reshape(H), beta.reshape(H), w2.reshape(H)), axis=1
    ).astype(jnp.float32)                                               # (H, 3)
    b2s = b2.reshape(1, 1).astype(jnp.float32)                          # (1, 1)

    vmem = pl.BlockSpec(memory_space=pltpu.MemorySpace.VMEM)
    smem = pl.BlockSpec(memory_space=pltpu.MemorySpace.SMEM)

    flops = 2 * N * D * H + 2 * N * H + 8 * N * H
    bytes_accessed = 4 * (D * N + H * D + 3 * H + 1 + N)

    out = pl.pallas_call(
        cvnp_kernel,
        out_shape=jax.ShapeDtypeStruct((1, N), jnp.float32),
        in_specs=[vmem, vmem, vmem, smem],
        out_specs=vmem,
        cost_estimate=pl.CostEstimate(
            flops=flops, transcendentals=H, bytes_accessed=bytes_accessed
        ),
    )(xT, w1t, pp, b2s)

    return out.T                                                        # (N, 1)


def init_params(key, num_labels, hidden=8):
    d_in = 1 + 2 * num_labels
    k1, k2, k3, k4 = jax.random.split(key, 4)
    # PyTorch Linear default init: uniform +/- 1/sqrt(fan_in)
    bound1 = 1.0 / jnp.sqrt(d_in)
    w1 = jax.random.uniform(k1, (d_in, hidden), jnp.float32, -bound1, bound1)
    b1 = jax.random.uniform(k2, (1, hidden), jnp.float32, -bound1, bound1)
    # BatchNorm1d defaults: weight=1, bias=0
    gamma = jnp.ones((1, hidden), jnp.float32)
    beta = jnp.zeros((1, hidden), jnp.float32)
    bound2 = 1.0 / jnp.sqrt(hidden)
    w2 = jax.random.uniform(k3, (hidden, 1), jnp.float32, -bound2, bound2)
    b2 = jax.random.uniform(k4, (1, 1), jnp.float32, -bound2, bound2)
    return (w1, b1, gamma, beta, w2, b2)


def reference_forward(X_train, y_train, y_target, params):
    # Pure-JAX reference of the PyTorch forward (train-mode BatchNorm1d).
    # NOTE: keeps b1, which verifies that dropping it in the kernel is exact.
    w1, b1, gamma, beta, w2, b2 = params
    x = jnp.concatenate((X_train.reshape(X_train.shape[0], 1), y_train, y_target), axis=1)
    h = x @ w1 + b1
    mean = jnp.mean(h, axis=0, keepdims=True)
    var = jnp.mean((h - mean) ** 2, axis=0, keepdims=True)
    h = (h - mean) / jnp.sqrt(var + BN_EPS) * gamma + beta
    h = jnp.maximum(h, 0.0)
    return h @ w2 + b2


if __name__ == "__main__":
    num_labels = 4          # settings.num_labels
    batch = 16

    key = jax.random.PRNGKey(0)
    kx, ky, kt, kp = jax.random.split(key, 4)

    X_train = jax.random.normal(kx, (batch,), jnp.float32)
    y_train = jax.random.normal(ky, (batch, num_labels), jnp.float32)
    y_target = jax.random.normal(kt, (batch, num_labels), jnp.float32)

    params = init_params(kp, num_labels)

    out = jax.block_until_ready(cvnp_forward(X_train, y_train, y_target, params))
    ref = reference_forward(X_train, y_train, y_target, params)

    assert out.shape == (batch, 1)
    assert jnp.allclose(out, ref, atol=1e-4, rtol=1e-4)

    print("KERNEL_OK")
</pallas_src>

<mosaic_0001>
module attributes {stable_mosaic.version = 11 : i64} {
  func.func @cvnp_kernel(%arg0: memref<9x16xf32, #tpu.memory_space<vmem>>, %arg1: memref<8x9xf32, #tpu.memory_space<vmem>>, %arg2: memref<8x3xf32, #tpu.memory_space<vmem>>, %arg3: memref<1x1xf32, #tpu.memory_space<smem>>, %arg4: memref<1x16xf32, #tpu.memory_space<vmem>>) attributes {dimension_semantics = [], scalar_prefetch = 0 : i64, scratch_operands = 0 : i64, tpu.core_type = #tpu.core_type<tc>} {
    %c0 = arith.constant 0 : index
    %c0_0 = arith.constant 0 : index
    %0 = vector.load %arg0[%c0, %c0_0] : memref<9x16xf32, #tpu.memory_space<vmem>>, vector<9x16xf32>
    %c0_1 = arith.constant 0 : index
    %c0_2 = arith.constant 0 : index
    %1 = vector.load %arg1[%c0_1, %c0_2] : memref<8x9xf32, #tpu.memory_space<vmem>>, vector<8x9xf32>
    %cst = arith.constant dense<0.000000e+00> : vector<8x16xf32>
    %2 = tpu.matmul %1, %0, %cst {dimension_numbers = #tpu.dot_dimension_numbers<[1], [0], [0], [1], [0, 0, 1, 1], [], []>} : vector<8x9xf32>, vector<9x16xf32>, vector<8x16xf32> -> vector<8x16xf32>
    %cst_3 = arith.constant dense<0.000000e+00> : vector<8xf32>
    %3 = vector.multi_reduction <add>, %2, %cst_3 [1] : vector<8x16xf32> to vector<8xf32>
    %4 = vector.shape_cast %3 : vector<8xf32> to vector<8x1xf32>
    %cst_4 = arith.constant 1.600000e+01 : f32
    %5 = vector.broadcast %cst_4 : f32 to vector<8x1xf32>
    %6 = arith.divf %4, %5 : vector<8x1xf32>
    %7 = arith.mulf %2, %2 : vector<8x16xf32>
    %cst_5 = arith.constant dense<0.000000e+00> : vector<8xf32>
    %8 = vector.multi_reduction <add>, %7, %cst_5 [1] : vector<8x16xf32> to vector<8xf32>
    %9 = vector.shape_cast %8 : vector<8xf32> to vector<8x1xf32>
    %cst_6 = arith.constant 1.600000e+01 : f32
    %10 = vector.broadcast %cst_6 : f32 to vector<8x1xf32>
    %11 = arith.divf %9, %10 : vector<8x1xf32>
    %12 = arith.mulf %6, %6 : vector<8x1xf32>
    %13 = arith.subf %11, %12 : vector<8x1xf32>
    %c0_7 = arith.constant 0 : index
    %c0_8 = arith.constant 0 : index
    %14 = vector.load %arg2[%c0_7, %c0_8] : memref<8x3xf32, #tpu.memory_space<vmem>>, vector<8x3xf32>
    %15 = vector.extract_strided_slice %14 {offsets = [0, 0], sizes = [8, 1], strides = [1, 1]} : vector<8x3xf32> to vector<8x1xf32>
    %16 = vector.extract_strided_slice %14 {offsets = [0, 1], sizes = [8, 1], strides = [1, 1]} : vector<8x3xf32> to vector<8x1xf32>
    %17 = vector.extract_strided_slice %14 {offsets = [0, 2], sizes = [8, 1], strides = [1, 1]} : vector<8x3xf32> to vector<8x1xf32>
    %cst_9 = arith.constant 9.99999974E-6 : f32
    %18 = vector.broadcast %cst_9 : f32 to vector<8x1xf32>
    %19 = arith.addf %13, %18 : vector<8x1xf32>
    %20 = math.rsqrt %19 : vector<8x1xf32>
    %21 = arith.mulf %15, %20 : vector<8x1xf32>
    %22 = arith.mulf %6, %21 : vector<8x1xf32>
    %23 = arith.subf %16, %22 : vector<8x1xf32>
    %24 = vector.broadcast %21 : vector<8x1xf32> to vector<8x16xf32>
    %25 = arith.mulf %2, %24 : vector<8x16xf32>
    %26 = vector.broadcast %23 : vector<8x1xf32> to vector<8x16xf32>
    %27 = arith.addf %25, %26 : vector<8x16xf32>
    %cst_10 = arith.constant 0.000000e+00 : f32
    %28 = vector.broadcast %cst_10 : f32 to vector<8x16xf32>
    %29 = arith.maximumf %27, %28 : vector<8x16xf32>
    %30 = vector.broadcast %17 : vector<8x1xf32> to vector<8x16xf32>
    %31 = arith.mulf %29, %30 : vector<8x16xf32>
    %cst_11 = arith.constant dense<0.000000e+00> : vector<16xf32>
    %32 = vector.multi_reduction <add>, %31, %cst_11 [0] : vector<8x16xf32> to vector<16xf32>
    %33 = vector.shape_cast %32 : vector<16xf32> to vector<1x16xf32>
    %c0_12 = arith.constant 0 : index
    %c0_13 = arith.constant 0 : index
    %34 = memref.load %arg3[%c0_12, %c0_13] : memref<1x1xf32, #tpu.memory_space<smem>>
    %35 = vector.broadcast %34 : f32 to vector<1x16xf32>
    %36 = arith.addf %33, %35 : vector<1x16xf32>
    %c0_14 = arith.constant 0 : index
    %c0_15 = arith.constant 0 : index
    %37 = vector.load %arg4[%c0_14, %c0_15] : memref<1x16xf32, #tpu.memory_space<vmem>>, vector<1x16xf32>
    tpu.vector_store %arg4[%c0_14, %c0_15], %36 {strides = array<i32>} : memref<1x16xf32, #tpu.memory_space<vmem>>, vector<1x16xf32>,
    return
  }
}

</mosaic_0001>

<llo_original>
// kernel: tpu_custom_call.1
$region0: #{tpu_custom_call.1}
  #allocation0 [shape = 'u32[]', space=smem, size = 0x4, offset = 0x4, fixed_abs, tag = 'smem constant byte address 0x4 - core index']
  #allocation1 [shape = 'u32[144,128]{1,0:T(1,128)}', space=vmem, size = 0x12000, scoped, tag = 'internal scratch']
  #allocation2 [shape = 'f32[1,1]{1,0:T(1,128)S(6)}', space=smem, size = 0x200, scoped, tag = 'scoped memory for tpu_custom_call.1']
  %s0 = inlined_call_operand.hbm [shape: f32[9,16], index: 0, kind: input, shape index: {}]
  %s1 = inlined_call_operand.vmem [shape: f32[8,9], index: 1, kind: input, shape index: {}]
  %s2 = inlined_call_operand.vmem [shape: f32[8,3], index: 2, kind: input, shape index: {}]
  %s3 = inlined_call_operand.<no memory space> [shape: f32[1,1], index: 3, kind: input, shape index: {}]
  %s4 = inlined_call_operand.hbm [shape: f32[1,16], index: 4, kind: output, shape index: {}]
  %s5 = sld [smem:[#allocation0]]
  $region30: #{tpu_custom_call.1} parent=0
    _
  %s7 = ssub.s32 1, %s5
  %s8 = scalar_select 0, %s7, %s5
  %9 = sst [smem:[#allocation2]] %s3
  $region1: #{tpu_custom_call.1} parent=0
    #allocation3 [shape = 'u8[8192]{0}', space=vmem, size = 0x2000, scoped, tag = 'input window, operand 0, single buffered']
    #allocation4 [shape = 's32[1]{0}', space=sflag, size = 0x4, scoped, tag = 'scoped memory for tpu_custom_call.1']
    #allocation5 [shape = 's32[1]{0}', space=sflag, size = 0x4, scoped, tag = 'scoped memory for tpu_custom_call.1']
    #allocation6 [shape = 'u8[512]{0}', space=vmem, size = 0x400, scoped, tag = 'output window, operand 0, single buffered']
    %10 = vsyncpa [#allocation4], 0
    %11 = vsyncpa [#allocation5], 0
    // Predicated region
    $region2: #{tpu_custom_call.1} parent=1 // pred_check
      _
    $region3: #{tpu_custom_call.1} parent=1 // pred_check_branch
      %13 = sbr.rel (0) target = $region5
    $region4: #{tpu_custom_call.1} parent=1 // pred_region
      %s15 = ssub.s32 256, 256
      %16 = vsyncadd [#allocation4], %s15
      %s17 = sshll.u32 [#allocation3], 4
      %s18 = int_to_ptr.vmem [resolvable:$true] %s17
      %23 = dma.hbm_to_vmem [thread:$0]  %s0, 256, %s18, [#allocation4], 128, 128, 8
    $region5: #{tpu_custom_call.1} parent=1 // pred_fallthru
      _
    // Predicated region
    $region6: #{tpu_custom_call.1} parent=1 // pred_check
      _
    $region7: #{tpu_custom_call.1} parent=1 // pred_check_branch
      %25 = sbr.rel (0) target = $region9
    $region8: #{tpu_custom_call.1} parent=1 // pred_region
      _
    $region9: #{tpu_custom_call.1} parent=1 // pred_fallthru
      _
    // Predicated region
    $region10: #{tpu_custom_call.1} parent=1 // pred_check
      _
    $region11: #{tpu_custom_call.1} parent=1 // pred_check_branch
      %27 = sbr.rel (0) target = $region13
    $region12: #{tpu_custom_call.1} parent=1 // pred_region
      _
    $region13: #{tpu_custom_call.1} parent=1 // pred_fallthru
      _
    // Predicated region
    $region14: #{tpu_custom_call.1} parent=1 // pred_check
      _
    $region15: #{tpu_custom_call.1} parent=1 // pred_check_branch
      %29 = sbr.rel (0) target = $region17
    $region16: #{tpu_custom_call.1} parent=1 // pred_region
      _
    $region17: #{tpu_custom_call.1} parent=1 // pred_fallthru
      _
    // Predicated region
    $region18: #{tpu_custom_call.1} parent=1 // pred_check
      _
    $region19: #{tpu_custom_call.1} parent=1 // pred_check_branch
      %31 = sbr.rel (0) target = $region21
    $region20: #{tpu_custom_call.1} parent=1 // pred_region
      %32 = dma.done [#allocation4], 256
    $region21: #{tpu_custom_call.1} parent=1 // pred_fallthru
      _
    %v33 = vld [vmem:[#allocation3] sm:$0xff]
    %v34 = vld [vmem:[#allocation3 + $0x8] sm:$0x1]
    %v35 = vld [vmem:[%s1] sm:$0xff]
    %vm36 = vcmask 72704
    %v38 = vsel %vm36, %v35, 0
    %vm40 = vcmask 1040384
    %v42 = vsel %vm40, %v34, 0
    %44 = vmatprep.subr.mxu0 0.0
    %45 = vmatpush1.msra.mxu0 %v33
    %46 = vmatprep.subr.mxu0 0.0
    %47 = vmatpush1.msra.mxu0 %v42
    %48 = vmatprep.subr.mxu0 0.0
    %49 = vmatpush1.msra.mxu0 0.0
    %50 = vmatprep.subr.mxu0 0.0
    %51 = vmatpush1.msra.mxu0 0.0
    %52 = vmatprep.subr.mxu0 0.0
    %53 = vmatpush1.msra.mxu0 0.0
    %54 = vmatprep.subr.mxu0 0.0
    %55 = vmatpush1.msra.mxu0 0.0
    %56 = vmatprep.subr.mxu0 0.0
    %57 = vmatpush1.msra.mxu0 0.0
    %58 = vmatprep.subr.mxu0 0.0
    %59 = vmatpush1.msra.mxu0 0.0
    %60 = vmatprep.subr.mxu0 0.0
    %61 = vmatpush1.msra.mxu0 0.0
    %62 = vmatprep.subr.mxu0 0.0
    %63 = vmatpush1.msra.mxu0 0.0
    %64 = vmatprep.subr.mxu0 0.0
    %65 = vmatpush1.msra.mxu0 0.0
    %66 = vmatprep.subr.mxu0 0.0
    %67 = vmatpush1.msra.mxu0 0.0
    %68 = vmatprep.subr.mxu0 0.0
    %69 = vmatpush1.msra.mxu0 0.0
    %70 = vmatprep.subr.mxu0 0.0
    %71 = vmatpush1.msra.mxu0 0.0
    %72 = vmatprep.subr.mxu0 0.0
    %73 = vmatpush1.msra.mxu0 0.0
    %74 = vmatprep.subr.mxu0 0.0
    %75 = vmatpush1.msra.mxu0 0.0
    %76 = vmatprep.subr.mxu0 0.0
    %77 = vmatpush1.msra.mxu0 0.0
    %78 = vmatprep.subr.mxu0 0.0
    %79 = vmatpush1.msra.mxu0 0.0
    %80 = vmatprep.subr.mxu0 0.0
    %81 = vmatpush1.msra.mxu0 0.0
    %82 = vmatprep.subr.mxu0 0.0
    %83 = vmatpush1.msra.mxu0 0.0
    %84 = vmatprep.subr.mxu0 0.0
    %85 = vmatpush1.msra.mxu0 0.0
    %86 = vmatprep.subr.mxu0 0.0
    %87 = vmatpush1.msra.mxu0 0.0
    %88 = vmatprep.subr.mxu0 0.0
    %89 = vmatpush1.msra.mxu0 0.0
    %90 = vmatprep.subr.mxu0 0.0
    %91 = vmatpush1.msra.mxu0 0.0
    %92 = vmatprep.subr.mxu0 0.0
    %93 = vmatpush1.msra.mxu0 0.0
    %94 = vmatprep.subr.mxu0 0.0
    %95 = vmatpush1.msra.mxu0 0.0
    %96 = vmatprep.subr.mxu0 0.0
    %97 = vmatpush1.msra.mxu0 0.0
    %98 = vmatprep.subr.mxu0 0.0
    %99 = vmatpush1.msra.mxu0 0.0
    %100 = vmatprep.subr.mxu0 0.0
    %101 = vmatpush1.msra.mxu0 0.0
    %102 = vmatprep.subr.mxu0 0.0
    %103 = vmatpush1.msra.mxu0 0.0
    %104 = vmatprep.subr.mxu0 0.0
    %105 = vmatpush1.msra.mxu0 0.0
    %106 = vmatprep.subr.mxu0 0.0
    %107 = vmatpush1.msra.mxu0 0.0
    %108 = vmatprep.mubr.f32.mxu0 0.0
    %109 = vmatmul.mubr.f32.gmra.mrb[0].mxu0 %v38
    %v110 = vpop.f32.mrb[0].mxu0
    %v111 = vadd.f32 0.0, %v110
    %v112 = vpop.f32.mrb[0].mxu0
    %113 = vdwg.mxu0
    %vm114 = vcmask 130048
    %v115 = vsel %vm114, %v111, 0.0
    %116 = vadd.xlane.f32.xlu0 %v115
    %v117 = vpop.xlane.xlu0 %116
    %v118 = vrcp.pop 16.0
    %v119 = vmul.f32 %v117, %v118
    %v120 = vmul.f32 %v111, %v111
    %v121 = vsel %vm114, %v120, 0.0
    %122 = vadd.xlane.f32.xlu0 %v121
    %v123 = vpop.xlane.xlu0 %122
    %v124 = vmul.f32 %v123, %v118
    %v125 = vmul.f32 %v119, %v119
    %v126 = vsub.f32 %v124, %v125
    %v127 = vld [vmem:[%s2] sm:$0xff]
    %v128 = vadd.f32 %v126, 1e-05
    %v129 = vrsqrt.pop %v128
    %v130 = vmul.f32 %v127, %v129
    %v131 = vmul.f32 %v119, %v130
    %133 = vrot.lane.b32.xlu0 %v131, 1
    %v134 = vpop.permute.xlu0 %133
    %v136 = vsub.f32 %v127, %v134
    %138 = vset.pattern.permute.xlu0 0
    %139 = vperm.xlu0 %138, %v130
    %v140 = vpop.permute.xlu0 %139
    %v142 = vmul.f32 %v111, %v140
    %144 = vset.pattern.permute.xlu0 1
    %145 = vperm.xlu0 %144, %v136
    %v146 = vpop.permute.xlu0 %145
    %v148 = vadd.f32 %v142, %v146
    %v149 = vmax.f32 %v148, 0.0
    %151 = vset.pattern.permute.xlu0 2
    %152 = vperm.xlu0 %151, %v127
    %v153 = vpop.permute.xlu0 %152
    %v155 = vmul.f32 %v149, %v153
    %v156 = vsel %vm114, %v155, 0.0
    %v157 = vrot.slane %v156, 4
    %v158 = vadd.f32 %v156, %v157
    %v159 = vrot.slane %v158, 2
    %v160 = vadd.f32 %v158, %v159
    %v161 = vrot.slane %v160, 1
    %v162 = vadd.f32 %v160, %v161
    %s163 = sld [smem:[#allocation2]]
    %v164 = vstv %s163
    %v165 = vadd.f32 %v162, %v164
    %vm166 = vcmask 122880
    %167 = vst.msk [vmem:[#allocation6] sm:$0x1] %vm166, %v165
    // Predicated region
    $region22: #{tpu_custom_call.1} parent=1 // pred_check
      _
    $region23: #{tpu_custom_call.1} parent=1 // pred_check_branch
      %169 = sbr.rel (0) target = $region25
    $region24: #{tpu_custom_call.1} parent=1 // pred_region
      %s171 = ssub.s32 16, 16
      %172 = vsyncadd [#allocation5], %s171
      %s174 = sshll.u32 [#allocation6], 4
      %s175 = int_to_ptr.vmem [resolvable:$true] %s174
      %177 = dma.vmem_to_hbm [thread:$0]  %s175, 16, %s4, [#allocation5]
    $region25: #{tpu_custom_call.1} parent=1 // pred_fallthru
      _
    // Predicated region
    $region26: #{tpu_custom_call.1} parent=1 // pred_check
      _
    $region27: #{tpu_custom_call.1} parent=1 // pred_check_branch
      %179 = sbr.rel (0) target = $region29
    $region28: #{tpu_custom_call.1} parent=1 // pred_region
      %180 = dma.done [#allocation5], 16
    $region29: #{tpu_custom_call.1} parent=1 // pred_fallthru
      _
    %181 = vsyncpa [#allocation4], 1
    %182 = vsyncpa [#allocation5], 1

</llo_original>
